<compile_context>
chip_gen: v7x
topology: tpu7x:2x2x1
jax: 0.10.0
libtpu: 0.0.40
codegen_flags: <defaults>
</compile_context>

<pallas_src>
import jax
import jax.numpy as jnp
import numpy as np
from jax import lax
from jax.experimental import pallas as pl
from jax.experimental.pallas import tpu as pltpu


def _round_up(x, m):
    return (x + m - 1) // m * m


# ----------------------------------------------------------------------------
# Pallas kernel: fused input projection + unrolled GRU recurrence over frames.
# ----------------------------------------------------------------------------
def mlp_ctx_gru_kernel(feat_ref,    # (T, BN, F)   f32   F = dim_ent + 2*num_bin
                       w_in_ref,    # (F, H)       f32   [W_ent ; W_bin] stacked
                       b_in_ref,    # (1, H)       f32   ent_embed bias
                       w_ih_ref,    # (H, 3H)      f32   fused input->hidden (r,z,n)
                       b_ih_ref,    # (1, 3H)      f32
                       w_hh_ref,    # (H, 3H)      f32   fused hidden->hidden (r,z,n)
                       b_hh_ref,    # (1, 3H)      f32
                       out_ref):    # (BN, H)      f32
    T, BN, F = feat_ref.shape
    H = w_in_ref.shape[1]

    # ---- hoisted, batched input path: all T*BN rows feed the MXU at once ----
    feat2d = feat_ref[...].reshape(T * BN, F)
    x = (jnp.dot(feat2d, w_in_ref[...], preferred_element_type=jnp.float32)
         + b_in_ref[...])                                                  # (T*BN, H)
    igates = (jnp.dot(x, w_ih_ref[...], preferred_element_type=jnp.float32)
              + b_ih_ref[...])                                             # (T*BN, 3H)

    # ---- loop-invariant loads / broadcasts hoisted out of the recurrence ----
    w_hh = w_hh_ref[...]
    b_hh = jnp.broadcast_to(b_hh_ref[...], (BN, 3 * H))

    # ---- GRU recurrence: one fused (H,3H) matmul + VPU/EUP gates per step ----
    # T is small & static -> fully unrolled so the LLO scheduler can overlap
    # the step-(t+1) matmul with the step-t transcendentals.
    # (For very long T, switch to lax.fori_loop over a VMEM scratch of igates.)
    h = jnp.zeros((BN, H), jnp.float32)
    for t in range(T):
        ig = igates[t * BN:(t + 1) * BN, :]                                # (BN, 3H)
        hg = jnp.dot(h, w_hh, preferred_element_type=jnp.float32) + b_hh   # (BN, 3H)
        r = jax.nn.sigmoid(ig[:, :H] + hg[:, :H])
        z = jax.nn.sigmoid(ig[:, H:2 * H] + hg[:, H:2 * H])
        n = jnp.tanh(ig[:, 2 * H:] + r * hg[:, 2 * H:])
        h = (1.0 - z) * n + z * h

    out_ref[...] = h


# ----------------------------------------------------------------------------
# Wrapper: build concatenated features, fuse weights, pad / tile N, call kernel.
# ----------------------------------------------------------------------------
def mlp_context_encoder(entities, binary_features, params, *, block_n=256):
    """entities: (bsz, num_ent, T, dim_ent) float
       binary_features: (bsz, num_ent, T, num_bin) int32 indices in [0, 2*num_bin)
       returns: (bsz, num_ent, H) float32"""
    bsz, num_ent, T, dim_ent = entities.shape
    nbin2 = params["w_bin"].shape[0]          # 2 * num_bin
    H = params["w_ent"].shape[1]
    N = bsz * num_ent
    F = dim_ent + nbin2

    # embedding-bag as a count matmul: sum_k bin_embed[idx_k] == counts @ W_bin
    # (out-of-range indices silently map to zero, unlike torch.nn.Embedding which errors)
    counts = jax.nn.one_hot(binary_features, nbin2, dtype=jnp.float32).sum(axis=3)

    # single concatenated feature tensor, time-major flattened batch: (T, N, F)
    feat = jnp.concatenate([entities.astype(jnp.float32), counts], axis=-1)
    feat = jnp.transpose(feat.reshape(N, T, F), (1, 0, 2))

    # pad flattened batch to a sublane-aligned tile, shard rows over a parallel grid
    N8 = _round_up(N, 8)
    bn = N8 if N8 <= block_n else block_n     # block_n is a multiple of 8
    Np = _round_up(N8, bn)
    if Np != N:
        feat = jnp.pad(feat, ((0, 0), (0, Np - N), (0, 0)))

    # ---- fuse weights (one-time, outside the kernel) ----
    w_in = jnp.concatenate([params["w_ent"], params["w_bin"]], axis=0)     # (F, H)
    b_in = params["b_ent"]                                                 # (1, H)
    w_ih = jnp.concatenate([params["w_ih"][g] for g in range(3)], axis=1)  # (H, 3H)
    b_ih = jnp.concatenate([params["b_ih"][g] for g in range(3)], axis=1)  # (1, 3H)
    w_hh = jnp.concatenate([params["w_hh"][g] for g in range(3)], axis=1)  # (H, 3H)
    b_hh = jnp.concatenate([params["b_hh"][g] for g in range(3)], axis=1)  # (1, 3H)

    grid = (Np // bn,)
    full = lambda shape: pl.BlockSpec(shape, lambda i: (0,) * len(shape))

    out = pl.pallas_call(
        mlp_ctx_gru_kernel,
        out_shape=jax.ShapeDtypeStruct((Np, H), jnp.float32),
        grid=grid,
        in_specs=[
            pl.BlockSpec((T, bn, F), lambda i: (0, i, 0)),   # features, tiled over N
            full((F, H)), full((1, H)),                      # fused input projection
            full((H, 3 * H)), full((1, 3 * H)),              # fused W_ih / b_ih
            full((H, 3 * H)), full((1, 3 * H)),              # fused W_hh / b_hh
        ],
        out_specs=pl.BlockSpec((bn, H), lambda i: (i, 0)),
        compiler_params=pltpu.CompilerParams(
            dimension_semantics=("parallel",)),
    )(feat, w_in, b_in, w_ih, b_ih, w_hh, b_hh)

    # dropout == identity (inference); drop padded rows
    return out[:N].reshape(bsz, num_ent, H)


# ----------------------------------------------------------------------------
# Pure-JAX reference (mirrors the PyTorch forward in eval mode).
# ----------------------------------------------------------------------------
def reference(entities, binary_features, params):
    bsz, num_ent, T, dim_ent = entities.shape
    nbin2 = params["w_bin"].shape[0]
    H = params["w_ent"].shape[1]
    N = bsz * num_ent

    x_ent = entities.astype(jnp.float32) @ params["w_ent"] + params["b_ent"]
    onehot = jax.nn.one_hot(binary_features, nbin2, dtype=jnp.float32)
    x_bin = onehot.sum(axis=3) @ params["w_bin"]
    x = (x_ent + x_bin).reshape(N, T, H)

    def cell(h, xt):
        i_r = xt @ params["w_ih"][0] + params["b_ih"][0]
        i_z = xt @ params["w_ih"][1] + params["b_ih"][1]
        i_n = xt @ params["w_ih"][2] + params["b_ih"][2]
        h_r = h @ params["w_hh"][0] + params["b_hh"][0]
        h_z = h @ params["w_hh"][1] + params["b_hh"][1]
        h_n = h @ params["w_hh"][2] + params["b_hh"][2]
        r = jax.nn.sigmoid(i_r + h_r)
        z = jax.nn.sigmoid(i_z + h_z)
        n = jnp.tanh(i_n + r * h_n)
        h_new = (1.0 - z) * n + z * h
        return h_new, None

    h, _ = lax.scan(cell, jnp.zeros((N, H), jnp.float32),
                    jnp.transpose(x, (1, 0, 2)))
    return h.reshape(bsz, num_ent, H)


# ----------------------------------------------------------------------------
# Deterministic parameter init (shapes from MlpContextEncoder.__init__).
# ----------------------------------------------------------------------------
def init_params(key, dim_ent, num_bin, nembed_ctx, init_range=0.1):
    ks = jax.random.split(key, 8)
    u = lambda k, shape: jax.random.uniform(
        k, shape, jnp.float32, -init_range, init_range)
    H = nembed_ctx
    return {
        "w_ent": u(ks[0], (dim_ent, H)),        # ent_embed.weight^T
        "b_ent": u(ks[1], (1, H)),              # ent_embed.bias
        "w_bin": u(ks[2], (num_bin * 2, H)),    # bin_embed.weight
        "w_ih": u(ks[3], (3, H, H)),            # GRU W_{ir,iz,in}^T (gate order r,z,n)
        "b_ih": u(ks[4], (3, 1, H)),
        "w_hh": u(ks[5], (3, H, H)),            # GRU W_{hr,hz,hn}^T
        "b_hh": u(ks[6], (3, 1, H)),
    }


if __name__ == "__main__":
    # small shapes consistent with the module
    bsz, num_ent, num_frames = 2, 7, 5
    dim_ent, num_bin, nembed_ctx = 4, 3, 32

    key = jax.random.PRNGKey(0)
    k_ent, k_bin, k_par = jax.random.split(key, 3)

    entities = jax.random.normal(
        k_ent, (bsz, num_ent, num_frames, dim_ent), jnp.float32)
    binary_features = jax.random.randint(
        k_bin, (bsz, num_ent, num_frames, num_bin), 0, num_bin * 2, jnp.int32)

    params = init_params(k_par, dim_ent, num_bin, nembed_ctx)

    out = mlp_context_encoder(entities, binary_features, params)
    out = jax.block_until_ready(out)

    ref = jax.block_until_ready(reference(entities, binary_features, params))
    assert out.shape == (bsz, num_ent, nembed_ctx), out.shape
    assert np.allclose(np.asarray(out), np.asarray(ref), rtol=1e-5, atol=1e-5), \
        np.max(np.abs(np.asarray(out) - np.asarray(ref)))

    print("KERNEL_OK")
</pallas_src>

<mosaic_0001>
module attributes {stable_mosaic.version = 11 : i64} {
  func.func @mlp_ctx_gru_kernel(%arg0: i32, %arg1: memref<5x16x10xf32, #tpu.memory_space<vmem>>, %arg2: memref<10x32xf32, #tpu.memory_space<vmem>>, %arg3: memref<1x32xf32, #tpu.memory_space<vmem>>, %arg4: memref<32x96xf32, #tpu.memory_space<vmem>>, %arg5: memref<1x96xf32, #tpu.memory_space<vmem>>, %arg6: memref<32x96xf32, #tpu.memory_space<vmem>>, %arg7: memref<1x96xf32, #tpu.memory_space<vmem>>, %arg8: memref<16x32xf32, #tpu.memory_space<vmem>>) attributes {dimension_semantics = [#tpu.dimension_semantics<parallel>], iteration_bounds = array<i64: 1>, scalar_prefetch = 0 : i64, scratch_operands = 0 : i64, tpu.core_type = #tpu.core_type<tc>, window_params = [{transform_indices = @transform_0, window_bounds = array<i64: 5, 16, 10>}, {pipeline_mode = #tpu.pipeline_mode<synchronous>, transform_indices = @transform_1, window_bounds = array<i64: 10, 32>}, {pipeline_mode = #tpu.pipeline_mode<synchronous>, transform_indices = @transform_2, window_bounds = array<i64: 1, 32>}, {pipeline_mode = #tpu.pipeline_mode<synchronous>, transform_indices = @transform_3, window_bounds = array<i64: 32, 96>}, {pipeline_mode = #tpu.pipeline_mode<synchronous>, transform_indices = @transform_4, window_bounds = array<i64: 1, 96>}, {pipeline_mode = #tpu.pipeline_mode<synchronous>, transform_indices = @transform_5, window_bounds = array<i64: 32, 96>}, {pipeline_mode = #tpu.pipeline_mode<synchronous>, transform_indices = @transform_6, window_bounds = array<i64: 1, 96>}, {transform_indices = @transform_7, window_bounds = array<i64: 16, 32>}]} {
    %c0 = arith.constant 0 : index
    %c0_0 = arith.constant 0 : index
    %c0_1 = arith.constant 0 : index
    %0 = vector.load %arg1[%c0, %c0_0, %c0_1] : memref<5x16x10xf32, #tpu.memory_space<vmem>>, vector<5x16x10xf32>
    %1 = vector.shape_cast %0 : vector<5x16x10xf32> to vector<80x10xf32>
    %c0_2 = arith.constant 0 : index
    %c0_3 = arith.constant 0 : index
    %2 = vector.load %arg2[%c0_2, %c0_3] : memref<10x32xf32, #tpu.memory_space<vmem>>, vector<10x32xf32>
    %cst = arith.constant dense<0.000000e+00> : vector<80x32xf32>
    %3 = tpu.matmul %1, %2, %cst {dimension_numbers = #tpu.dot_dimension_numbers<[1], [0], [0], [1], [0, 0, 1, 1], [], []>} : vector<80x10xf32>, vector<10x32xf32>, vector<80x32xf32> -> vector<80x32xf32>
    %c0_4 = arith.constant 0 : index
    %c0_5 = arith.constant 0 : index
    %4 = vector.load %arg3[%c0_4, %c0_5] : memref<1x32xf32, #tpu.memory_space<vmem>>, vector<1x32xf32>
    %5 = vector.broadcast %4 : vector<1x32xf32> to vector<80x32xf32>
    %6 = arith.addf %3, %5 : vector<80x32xf32>
    %c0_6 = arith.constant 0 : index
    %c0_7 = arith.constant 0 : index
    %7 = vector.load %arg4[%c0_6, %c0_7] : memref<32x96xf32, #tpu.memory_space<vmem>>, vector<32x96xf32>
    %cst_8 = arith.constant dense<0.000000e+00> : vector<80x96xf32>
    %8 = tpu.matmul %6, %7, %cst_8 {dimension_numbers = #tpu.dot_dimension_numbers<[1], [0], [0], [1], [0, 0, 1, 1], [], []>} : vector<80x32xf32>, vector<32x96xf32>, vector<80x96xf32> -> vector<80x96xf32>
    %c0_9 = arith.constant 0 : index
    %c0_10 = arith.constant 0 : index
    %9 = vector.load %arg5[%c0_9, %c0_10] : memref<1x96xf32, #tpu.memory_space<vmem>>, vector<1x96xf32>
    %10 = vector.broadcast %9 : vector<1x96xf32> to vector<80x96xf32>
    %11 = arith.addf %8, %10 : vector<80x96xf32>
    %c0_11 = arith.constant 0 : index
    %c0_12 = arith.constant 0 : index
    %12 = vector.load %arg6[%c0_11, %c0_12] : memref<32x96xf32, #tpu.memory_space<vmem>>, vector<32x96xf32>
    %c0_13 = arith.constant 0 : index
    %c0_14 = arith.constant 0 : index
    %13 = vector.load %arg7[%c0_13, %c0_14] : memref<1x96xf32, #tpu.memory_space<vmem>>, vector<1x96xf32>
    %14 = vector.shape_cast %13 : vector<1x96xf32> to vector<1x96xf32>
    %15 = vector.broadcast %14 : vector<1x96xf32> to vector<16x96xf32>
    %cst_15 = arith.constant 0.000000e+00 : f32
    %16 = vector.broadcast %cst_15 : f32 to vector<16x32xf32>
    %17 = vector.extract_strided_slice %11 {offsets = [0, 0], sizes = [16, 96], strides = [1, 1]} : vector<80x96xf32> to vector<16x96xf32>
    %cst_16 = arith.constant dense<0.000000e+00> : vector<16x96xf32>
    %18 = tpu.matmul %16, %12, %cst_16 {dimension_numbers = #tpu.dot_dimension_numbers<[1], [0], [0], [1], [0, 0, 1, 1], [], []>} : vector<16x32xf32>, vector<32x96xf32>, vector<16x96xf32> -> vector<16x96xf32>
    %19 = arith.addf %18, %15 : vector<16x96xf32>
    %20 = vector.extract_strided_slice %17 {offsets = [0, 0], sizes = [16, 32], strides = [1, 1]} : vector<16x96xf32> to vector<16x32xf32>
    %21 = vector.extract_strided_slice %19 {offsets = [0, 0], sizes = [16, 32], strides = [1, 1]} : vector<16x96xf32> to vector<16x32xf32>
    %22 = arith.addf %20, %21 : vector<16x32xf32>
    %23 = arith.negf %22 : vector<16x32xf32>
    %24 = math.exp %23 : vector<16x32xf32>
    %cst_17 = arith.constant 1.000000e+00 : f32
    %25 = vector.broadcast %cst_17 : f32 to vector<16x32xf32>
    %26 = arith.addf %25, %24 : vector<16x32xf32>
    %27 = arith.divf %25, %26 : vector<16x32xf32>
    %28 = vector.extract_strided_slice %17 {offsets = [0, 32], sizes = [16, 32], strides = [1, 1]} : vector<16x96xf32> to vector<16x32xf32>
    %29 = vector.extract_strided_slice %19 {offsets = [0, 32], sizes = [16, 32], strides = [1, 1]} : vector<16x96xf32> to vector<16x32xf32>
    %30 = arith.addf %28, %29 : vector<16x32xf32>
    %31 = arith.negf %30 : vector<16x32xf32>
    %32 = math.exp %31 : vector<16x32xf32>
    %cst_18 = arith.constant 1.000000e+00 : f32
    %33 = vector.broadcast %cst_18 : f32 to vector<16x32xf32>
    %34 = arith.addf %33, %32 : vector<16x32xf32>
    %35 = arith.divf %33, %34 : vector<16x32xf32>
    %36 = vector.extract_strided_slice %17 {offsets = [0, 64], sizes = [16, 32], strides = [1, 1]} : vector<16x96xf32> to vector<16x32xf32>
    %37 = vector.extract_strided_slice %19 {offsets = [0, 64], sizes = [16, 32], strides = [1, 1]} : vector<16x96xf32> to vector<16x32xf32>
    %38 = arith.mulf %27, %37 : vector<16x32xf32>
    %39 = arith.addf %36, %38 : vector<16x32xf32>
    %40 = math.tanh %39 : vector<16x32xf32>
    %cst_19 = arith.constant 1.000000e+00 : f32
    %41 = vector.broadcast %cst_19 : f32 to vector<16x32xf32>
    %42 = arith.subf %41, %35 : vector<16x32xf32>
    %43 = arith.mulf %42, %40 : vector<16x32xf32>
    %44 = arith.mulf %35, %16 : vector<16x32xf32>
    %45 = arith.addf %43, %44 : vector<16x32xf32>
    %46 = vector.extract_strided_slice %11 {offsets = [16, 0], sizes = [16, 96], strides = [1, 1]} : vector<80x96xf32> to vector<16x96xf32>
    %cst_20 = arith.constant dense<0.000000e+00> : vector<16x96xf32>
    %47 = tpu.matmul %45, %12, %cst_20 {dimension_numbers = #tpu.dot_dimension_numbers<[1], [0], [0], [1], [0, 0, 1, 1], [], []>} : vector<16x32xf32>, vector<32x96xf32>, vector<16x96xf32> -> vector<16x96xf32>
    %48 = arith.addf %47, %15 : vector<16x96xf32>
    %49 = vector.extract_strided_slice %46 {offsets = [0, 0], sizes = [16, 32], strides = [1, 1]} : vector<16x96xf32> to vector<16x32xf32>
    %50 = vector.extract_strided_slice %48 {offsets = [0, 0], sizes = [16, 32], strides = [1, 1]} : vector<16x96xf32> to vector<16x32xf32>
    %51 = arith.addf %49, %50 : vector<16x32xf32>
    %52 = arith.negf %51 : vector<16x32xf32>
    %53 = math.exp %52 : vector<16x32xf32>
    %cst_21 = arith.constant 1.000000e+00 : f32
    %54 = vector.broadcast %cst_21 : f32 to vector<16x32xf32>
    %55 = arith.addf %54, %53 : vector<16x32xf32>
    %56 = arith.divf %54, %55 : vector<16x32xf32>
    %57 = vector.extract_strided_slice %46 {offsets = [0, 32], sizes = [16, 32], strides = [1, 1]} : vector<16x96xf32> to vector<16x32xf32>
    %58 = vector.extract_strided_slice %48 {offsets = [0, 32], sizes = [16, 32], strides = [1, 1]} : vector<16x96xf32> to vector<16x32xf32>
    %59 = arith.addf %57, %58 : vector<16x32xf32>
    %60 = arith.negf %59 : vector<16x32xf32>
    %61 = math.exp %60 : vector<16x32xf32>
    %cst_22 = arith.constant 1.000000e+00 : f32
    %62 = vector.broadcast %cst_22 : f32 to vector<16x32xf32>
    %63 = arith.addf %62, %61 : vector<16x32xf32>
    %64 = arith.divf %62, %63 : vector<16x32xf32>
    %65 = vector.extract_strided_slice %46 {offsets = [0, 64], sizes = [16, 32], strides = [1, 1]} : vector<16x96xf32> to vector<16x32xf32>
    %66 = vector.extract_strided_slice %48 {offsets = [0, 64], sizes = [16, 32], strides = [1, 1]} : vector<16x96xf32> to vector<16x32xf32>
    %67 = arith.mulf %56, %66 : vector<16x32xf32>
    %68 = arith.addf %65, %67 : vector<16x32xf32>
    %69 = math.tanh %68 : vector<16x32xf32>
    %cst_23 = arith.constant 1.000000e+00 : f32
    %70 = vector.broadcast %cst_23 : f32 to vector<16x32xf32>
    %71 = arith.subf %70, %64 : vector<16x32xf32>
    %72 = arith.mulf %71, %69 : vector<16x32xf32>
    %73 = arith.mulf %64, %45 : vector<16x32xf32>
    %74 = arith.addf %72, %73 : vector<16x32xf32>
    %75 = vector.extract_strided_slice %11 {offsets = [32, 0], sizes = [16, 96], strides = [1, 1]} : vector<80x96xf32> to vector<16x96xf32>
    %cst_24 = arith.constant dense<0.000000e+00> : vector<16x96xf32>
    %76 = tpu.matmul %74, %12, %cst_24 {dimension_numbers = #tpu.dot_dimension_numbers<[1], [0], [0], [1], [0, 0, 1, 1], [], []>} : vector<16x32xf32>, vector<32x96xf32>, vector<16x96xf32> -> vector<16x96xf32>
    %77 = arith.addf %76, %15 : vector<16x96xf32>
    %78 = vector.extract_strided_slice %75 {offsets = [0, 0], sizes = [16, 32], strides = [1, 1]} : vector<16x96xf32> to vector<16x32xf32>
    %79 = vector.extract_strided_slice %77 {offsets = [0, 0], sizes = [16, 32], strides = [1, 1]} : vector<16x96xf32> to vector<16x32xf32>
    %80 = arith.addf %78, %79 : vector<16x32xf32>
    %81 = arith.negf %80 : vector<16x32xf32>
    %82 = math.exp %81 : vector<16x32xf32>
    %cst_25 = arith.constant 1.000000e+00 : f32
    %83 = vector.broadcast %cst_25 : f32 to vector<16x32xf32>
    %84 = arith.addf %83, %82 : vector<16x32xf32>
    %85 = arith.divf %83, %84 : vector<16x32xf32>
    %86 = vector.extract_strided_slice %75 {offsets = [0, 32], sizes = [16, 32], strides = [1, 1]} : vector<16x96xf32> to vector<16x32xf32>
    %87 = vector.extract_strided_slice %77 {offsets = [0, 32], sizes = [16, 32], strides = [1, 1]} : vector<16x96xf32> to vector<16x32xf32>
    %88 = arith.addf %86, %87 : vector<16x32xf32>
    %89 = arith.negf %88 : vector<16x32xf32>
    %90 = math.exp %89 : vector<16x32xf32>
    %cst_26 = arith.constant 1.000000e+00 : f32
    %91 = vector.broadcast %cst_26 : f32 to vector<16x32xf32>
    %92 = arith.addf %91, %90 : vector<16x32xf32>
    %93 = arith.divf %91, %92 : vector<16x32xf32>
    %94 = vector.extract_strided_slice %75 {offsets = [0, 64], sizes = [16, 32], strides = [1, 1]} : vector<16x96xf32> to vector<16x32xf32>
    %95 = vector.extract_strided_slice %77 {offsets = [0, 64], sizes = [16, 32], strides = [1, 1]} : vector<16x96xf32> to vector<16x32xf32>
    %96 = arith.mulf %85, %95 : vector<16x32xf32>
    %97 = arith.addf %94, %96 : vector<16x32xf32>
    %98 = math.tanh %97 : vector<16x32xf32>
    %cst_27 = arith.constant 1.000000e+00 : f32
    %99 = vector.broadcast %cst_27 : f32 to vector<16x32xf32>
    %100 = arith.subf %99, %93 : vector<16x32xf32>
    %101 = arith.mulf %100, %98 : vector<16x32xf32>
    %102 = arith.mulf %93, %74 : vector<16x32xf32>
    %103 = arith.addf %101, %102 : vector<16x32xf32>
    %104 = vector.extract_strided_slice %11 {offsets = [48, 0], sizes = [16, 96], strides = [1, 1]} : vector<80x96xf32> to vector<16x96xf32>
    %cst_28 = arith.constant dense<0.000000e+00> : vector<16x96xf32>
    %105 = tpu.matmul %103, %12, %cst_28 {dimension_numbers = #tpu.dot_dimension_numbers<[1], [0], [0], [1], [0, 0, 1, 1], [], []>} : vector<16x32xf32>, vector<32x96xf32>, vector<16x96xf32> -> vector<16x96xf32>
    %106 = arith.addf %105, %15 : vector<16x96xf32>
    %107 = vector.extract_strided_slice %104 {offsets = [0, 0], sizes = [16, 32], strides = [1, 1]} : vector<16x96xf32> to vector<16x32xf32>
    %108 = vector.extract_strided_slice %106 {offsets = [0, 0], sizes = [16, 32], strides = [1, 1]} : vector<16x96xf32> to vector<16x32xf32>
    %109 = arith.addf %107, %108 : vector<16x32xf32>
    %110 = arith.negf %109 : vector<16x32xf32>
    %111 = math.exp %110 : vector<16x32xf32>
    %cst_29 = arith.constant 1.000000e+00 : f32
    %112 = vector.broadcast %cst_29 : f32 to vector<16x32xf32>
    %113 = arith.addf %112, %111 : vector<16x32xf32>
    %114 = arith.divf %112, %113 : vector<16x32xf32>
    %115 = vector.extract_strided_slice %104 {offsets = [0, 32], sizes = [16, 32], strides = [1, 1]} : vector<16x96xf32> to vector<16x32xf32>
    %116 = vector.extract_strided_slice %106 {offsets = [0, 32], sizes = [16, 32], strides = [1, 1]} : vector<16x96xf32> to vector<16x32xf32>
    %117 = arith.addf %115, %116 : vector<16x32xf32>
    %118 = arith.negf %117 : vector<16x32xf32>
    %119 = math.exp %118 : vector<16x32xf32>
    %cst_30 = arith.constant 1.000000e+00 : f32
    %120 = vector.broadcast %cst_30 : f32 to vector<16x32xf32>
    %121 = arith.addf %120, %119 : vector<16x32xf32>
    %122 = arith.divf %120, %121 : vector<16x32xf32>
    %123 = vector.extract_strided_slice %104 {offsets = [0, 64], sizes = [16, 32], strides = [1, 1]} : vector<16x96xf32> to vector<16x32xf32>
    %124 = vector.extract_strided_slice %106 {offsets = [0, 64], sizes = [16, 32], strides = [1, 1]} : vector<16x96xf32> to vector<16x32xf32>
    %125 = arith.mulf %114, %124 : vector<16x32xf32>
    %126 = arith.addf %123, %125 : vector<16x32xf32>
    %127 = math.tanh %126 : vector<16x32xf32>
    %cst_31 = arith.constant 1.000000e+00 : f32
    %128 = vector.broadcast %cst_31 : f32 to vector<16x32xf32>
    %129 = arith.subf %128, %122 : vector<16x32xf32>
    %130 = arith.mulf %129, %127 : vector<16x32xf32>
    %131 = arith.mulf %122, %103 : vector<16x32xf32>
    %132 = arith.addf %130, %131 : vector<16x32xf32>
    %133 = vector.extract_strided_slice %11 {offsets = [64, 0], sizes = [16, 96], strides = [1, 1]} : vector<80x96xf32> to vector<16x96xf32>
    %cst_32 = arith.constant dense<0.000000e+00> : vector<16x96xf32>
    %134 = tpu.matmul %132, %12, %cst_32 {dimension_numbers = #tpu.dot_dimension_numbers<[1], [0], [0], [1], [0, 0, 1, 1], [], []>} : vector<16x32xf32>, vector<32x96xf32>, vector<16x96xf32> -> vector<16x96xf32>
    %135 = arith.addf %134, %15 : vector<16x96xf32>
    %136 = vector.extract_strided_slice %133 {offsets = [0, 0], sizes = [16, 32], strides = [1, 1]} : vector<16x96xf32> to vector<16x32xf32>
    %137 = vector.extract_strided_slice %135 {offsets = [0, 0], sizes = [16, 32], strides = [1, 1]} : vector<16x96xf32> to vector<16x32xf32>
    %138 = arith.addf %136, %137 : vector<16x32xf32>
    %139 = arith.negf %138 : vector<16x32xf32>
    %140 = math.exp %139 : vector<16x32xf32>
    %cst_33 = arith.constant 1.000000e+00 : f32
    %141 = vector.broadcast %cst_33 : f32 to vector<16x32xf32>
    %142 = arith.addf %141, %140 : vector<16x32xf32>
    %143 = arith.divf %141, %142 : vector<16x32xf32>
    %144 = vector.extract_strided_slice %133 {offsets = [0, 32], sizes = [16, 32], strides = [1, 1]} : vector<16x96xf32> to vector<16x32xf32>
    %145 = vector.extract_strided_slice %135 {offsets = [0, 32], sizes = [16, 32], strides = [1, 1]} : vector<16x96xf32> to vector<16x32xf32>
    %146 = arith.addf %144, %145 : vector<16x32xf32>
    %147 = arith.negf %146 : vector<16x32xf32>
    %148 = math.exp %147 : vector<16x32xf32>
    %cst_34 = arith.constant 1.000000e+00 : f32
    %149 = vector.broadcast %cst_34 : f32 to vector<16x32xf32>
    %150 = arith.addf %149, %148 : vector<16x32xf32>
    %151 = arith.divf %149, %150 : vector<16x32xf32>
    %152 = vector.extract_strided_slice %133 {offsets = [0, 64], sizes = [16, 32], strides = [1, 1]} : vector<16x96xf32> to vector<16x32xf32>
    %153 = vector.extract_strided_slice %135 {offsets = [0, 64], sizes = [16, 32], strides = [1, 1]} : vector<16x96xf32> to vector<16x32xf32>
    %154 = arith.mulf %143, %153 : vector<16x32xf32>
    %155 = arith.addf %152, %154 : vector<16x32xf32>
    %156 = math.tanh %155 : vector<16x32xf32>
    %cst_35 = arith.constant 1.000000e+00 : f32
    %157 = vector.broadcast %cst_35 : f32 to vector<16x32xf32>
    %158 = arith.subf %157, %151 : vector<16x32xf32>
    %159 = arith.mulf %158, %156 : vector<16x32xf32>
    %160 = arith.mulf %151, %132 : vector<16x32xf32>
    %161 = arith.addf %159, %160 : vector<16x32xf32>
    %c0_36 = arith.constant 0 : index
    %c0_37 = arith.constant 0 : index
    %162 = vector.load %arg8[%c0_36, %c0_37] : memref<16x32xf32, #tpu.memory_space<vmem>>, vector<16x32xf32>
    tpu.vector_store %arg8[%c0_36, %c0_37], %161 {strides = array<i32>} : memref<16x32xf32, #tpu.memory_space<vmem>>, vector<16x32xf32>,
    return
  }
  func.func @transform_0(%arg0: i32) -> (i32, i32, i32) {
    %c0_i32 = arith.constant 0 : i32
    %c0_i32_0 = arith.constant 0 : i32
    %c0_i32_1 = arith.constant 0 : i32
    return %c0_i32, %arg0, %c0_i32_0 : i32, i32, i32
  }
  func.func @transform_1(%arg0: i32) -> (i32, i32) {
    %c0_i32 = arith.constant 0 : i32
    %c0_i32_0 = arith.constant 0 : i32
    %c0_i32_1 = arith.constant 0 : i32
    return %c0_i32, %c0_i32_0 : i32, i32
  }
  func.func @transform_2(%arg0: i32) -> (i32, i32) {
    %c0_i32 = arith.constant 0 : i32
    %c0_i32_0 = arith.constant 0 : i32
    %c0_i32_1 = arith.constant 0 : i32
    return %c0_i32, %c0_i32_0 : i32, i32
  }
  func.func @transform_3(%arg0: i32) -> (i32, i32) {
    %c0_i32 = arith.constant 0 : i32
    %c0_i32_0 = arith.constant 0 : i32
    %c0_i32_1 = arith.constant 0 : i32
    return %c0_i32, %c0_i32_0 : i32, i32
  }
  func.func @transform_4(%arg0: i32) -> (i32, i32) {
    %c0_i32 = arith.constant 0 : i32
    %c0_i32_0 = arith.constant 0 : i32
    %c0_i32_1 = arith.constant 0 : i32
    return %c0_i32, %c0_i32_0 : i32, i32
  }
  func.func @transform_5(%arg0: i32) -> (i32, i32) {
    %c0_i32 = arith.constant 0 : i32
    %c0_i32_0 = arith.constant 0 : i32
    %c0_i32_1 = arith.constant 0 : i32
    return %c0_i32, %c0_i32_0 : i32, i32
  }
  func.func @transform_6(%arg0: i32) -> (i32, i32) {
    %c0_i32 = arith.constant 0 : i32
    %c0_i32_0 = arith.constant 0 : i32
    %c0_i32_1 = arith.constant 0 : i32
    return %c0_i32, %c0_i32_0 : i32, i32
  }
  func.func @transform_7(%arg0: i32) -> (i32, i32) {
    %c0_i32 = arith.constant 0 : i32
    %c0_i32_0 = arith.constant 0 : i32
    return %arg0, %c0_i32 : i32, i32
  }
}

</mosaic_0001>

<llo_original>
// kernel: tpu_custom_call.1
$region0: #{tpu_custom_call.1}
  #allocation0 [shape = 'u32[]', space=smem, size = 0x4, offset = 0x4, fixed_abs, tag = 'smem constant byte address 0x4 - core index']
  #allocation1 [shape = 'u32[144,128]{1,0:T(1,128)}', space=vmem, size = 0x12000, scoped, tag = 'internal scratch']
  %s0 = inlined_call_operand.hbm [shape: f32[5,16,10], index: 0, kind: input, shape index: {}]
  %s1 = inlined_call_operand.hbm [shape: f32[10,32], index: 1, kind: input, shape index: {}]
  %s2 = inlined_call_operand.vmem [shape: f32[1,32], index: 2, kind: input, shape index: {}]
  %s3 = inlined_call_operand.hbm [shape: f32[32,96], index: 3, kind: input, shape index: {}]
  %s4 = inlined_call_operand.vmem [shape: f32[1,96], index: 4, kind: input, shape index: {}]
  %s5 = inlined_call_operand.hbm [shape: f32[32,96], index: 5, kind: input, shape index: {}]
  %s6 = inlined_call_operand.vmem [shape: f32[1,96], index: 6, kind: input, shape index: {}]
  %s7 = inlined_call_operand.hbm [shape: f32[16,32], index: 7, kind: output, shape index: {}]
  %s8 = sld [smem:[#allocation0]]
  $region54: #{tpu_custom_call.1} parent=0
    _
  %s10 = ssub.s32 1, %s8
  %s11 = scalar_select 0, %s10, %s8
  $region1: #{tpu_custom_call.1} parent=0
    #allocation2 [shape = 'u8[40960]{0}', space=vmem, size = 0xa000, scoped, tag = 'input window, operand 0, single buffered']
    #allocation3 [shape = 's32[1]{0}', space=sflag, size = 0x4, scoped, tag = 'scoped memory for tpu_custom_call.1']
    #allocation4 [shape = 's32[1]{0}', space=sflag, size = 0x4, scoped, tag = 'scoped memory for tpu_custom_call.1']
    #allocation5 [shape = 'u8[8192]{0}', space=vmem, size = 0x2000, scoped, tag = 'input window, operand 1, single buffered']
    #allocation6 [shape = 's32[1]{0}', space=sflag, size = 0x4, scoped, tag = 'scoped memory for tpu_custom_call.1']
    #allocation7 [shape = 'u8[16384]{0}', space=vmem, size = 0x4000, scoped, tag = 'input window, operand 3, single buffered']
    #allocation8 [shape = 'u8[16384]{0}', space=vmem, size = 0x4000, scoped, tag = 'input window, operand 5, single buffered']
    #allocation9 [shape = 's32[1]{0}', space=sflag, size = 0x4, scoped, tag = 'scoped memory for tpu_custom_call.1']
    #allocation10 [shape = 'u8[8192]{0}', space=vmem, size = 0x2000, scoped, tag = 'output window, operand 0, single buffered']
    %12 = vsyncpa [#allocation3], 0
    %13 = vsyncpa [#allocation6], 0
    %14 = vsyncpa [#allocation9], 0
    %15 = vsyncpa [#allocation4], 0
    // Predicated region
    $region2: #{tpu_custom_call.1} parent=1 // pred_check
      _
    $region3: #{tpu_custom_call.1} parent=1 // pred_check_branch
      %17 = sbr.rel (0) target = $region5
    $region4: #{tpu_custom_call.1} parent=1 // pred_region
      %s19 = ssub.s32 1280, 1280
      %20 = vsyncadd [#allocation3], %s19
      %s21 = sshll.u32 [#allocation2], 4
      %s22 = int_to_ptr.vmem [resolvable:$true] %s21
      %27 = dma.hbm_to_vmem [thread:$0]  %s0, 1280, %s22, [#allocation3], 128, 128, 8
    $region5: #{tpu_custom_call.1} parent=1 // pred_fallthru
      _
    // Predicated region
    $region6: #{tpu_custom_call.1} parent=1 // pred_check
      _
    $region7: #{tpu_custom_call.1} parent=1 // pred_check_branch
      %29 = sbr.rel (0) target = $region9
    $region8: #{tpu_custom_call.1} parent=1 // pred_region
      %s31 = ssub.s32 256, 256
      %32 = vsyncadd [#allocation6], %s31
      %s33 = sshll.u32 [#allocation5], 4
      %s34 = int_to_ptr.vmem [resolvable:$true] %s33
      %39 = dma.hbm_to_vmem [thread:$0]  %s1, 256, %s34, [#allocation6], 128, 128, 8
    $region9: #{tpu_custom_call.1} parent=1 // pred_fallthru
      _
    // Predicated region
    $region10: #{tpu_custom_call.1} parent=1 // pred_check
      _
    $region11: #{tpu_custom_call.1} parent=1 // pred_check_branch
      %41 = sbr.rel (0) target = $region13
    $region12: #{tpu_custom_call.1} parent=1 // pred_region
      _
    $region13: #{tpu_custom_call.1} parent=1 // pred_fallthru
      _
    // Predicated region
    $region14: #{tpu_custom_call.1} parent=1 // pred_check
      _
    $region15: #{tpu_custom_call.1} parent=1 // pred_check_branch
      %43 = sbr.rel (0) target = $region17
    $region16: #{tpu_custom_call.1} parent=1 // pred_region
      %s45 = ssub.s32 512, 512
      %46 = vsyncadd [#allocation6], %s45
      %s47 = sshll.u32 [#allocation7], 4
      %s48 = int_to_ptr.vmem [resolvable:$true] %s47
      %53 = dma.hbm_to_vmem [thread:$0]  %s3, 512, %s48, [#allocation6], 128, 128, 8
    $region17: #{tpu_custom_call.1} parent=1 // pred_fallthru
      _
    // Predicated region
    $region18: #{tpu_custom_call.1} parent=1 // pred_check
      _
    $region19: #{tpu_custom_call.1} parent=1 // pred_check_branch
      %55 = sbr.rel (0) target = $region21
    $region20: #{tpu_custom_call.1} parent=1 // pred_region
      _
    $region21: #{tpu_custom_call.1} parent=1 // pred_fallthru
      _
    // Predicated region
    $region22: #{tpu_custom_call.1} parent=1 // pred_check
      _
    $region23: #{tpu_custom_call.1} parent=1 // pred_check_branch
      %57 = sbr.rel (0) target = $region25
    $region24: #{tpu_custom_call.1} parent=1 // pred_region
      %s59 = ssub.s32 512, 512
      %60 = vsyncadd [#allocation9], %s59
      %s61 = sshll.u32 [#allocation8], 4
      %s62 = int_to_ptr.vmem [resolvable:$true] %s61
      %67 = dma.hbm_to_vmem [thread:$0]  %s5, 512, %s62, [#allocation9], 128, 128, 8
    $region25: #{tpu_custom_call.1} parent=1 // pred_fallthru
      _
    // Predicated region
    $region26: #{tpu_custom_call.1} parent=1 // pred_check
      _
    $region27: #{tpu_custom_call.1} parent=1 // pred_check_branch
      %69 = sbr.rel (0) target = $region29
    $region28: #{tpu_custom_call.1} parent=1 // pred_region
      _
    $region29: #{tpu_custom_call.1} parent=1 // pred_fallthru
      _
    // Predicated region
    $region30: #{tpu_custom_call.1} parent=1 // pred_check
      _
    $region31: #{tpu_custom_call.1} parent=1 // pred_check_branch
      %71 = sbr.rel (0) target = $region33
    $region32: #{tpu_custom_call.1} parent=1 // pred_region
      %72 = dma.done [#allocation3], 1280
    $region33: #{tpu_custom_call.1} parent=1 // pred_fallthru
      _
    // Predicated region
    $region34: #{tpu_custom_call.1} parent=1 // pred_check
      _
    $region35: #{tpu_custom_call.1} parent=1 // pred_check_branch
      %74 = sbr.rel (0) target = $region37
    $region36: #{tpu_custom_call.1} parent=1 // pred_region
      %75 = dma.done [#allocation6], 256
    $region37: #{tpu_custom_call.1} parent=1 // pred_fallthru
      _
    // Predicated region
    $region38: #{tpu_custom_call.1} parent=1 // pred_check
      _
    $region39: #{tpu_custom_call.1} parent=1 // pred_check_branch
      %77 = sbr.rel (0) target = $region41
    $region40: #{tpu_custom_call.1} parent=1 // pred_region
      %78 = dma.done [#allocation6], 512
    $region41: #{tpu_custom_call.1} parent=1 // pred_fallthru
      _
    // Predicated region
    $region42: #{tpu_custom_call.1} parent=1 // pred_check
      _
    $region43: #{tpu_custom_call.1} parent=1 // pred_check_branch
      %80 = sbr.rel (0) target = $region45
    $region44: #{tpu_custom_call.1} parent=1 // pred_region
      %81 = dma.done [#allocation9], 512
    $region45: #{tpu_custom_call.1} parent=1 // pred_fallthru
      _
    %v82 = vld [vmem:[#allocation2] sm:$0xff]
    %v83 = vld [vmem:[#allocation2 + $0x8] sm:$0xff]
    %v84 = vld [vmem:[#allocation2 + $0x10] sm:$0xff]
    %v85 = vld [vmem:[#allocation2 + $0x18] sm:$0xff]
    %v86 = vld [vmem:[#allocation2 + $0x20] sm:$0xff]
    %v87 = vld [vmem:[#allocation2 + $0x28] sm:$0xff]
    %v88 = vld [vmem:[#allocation2 + $0x30] sm:$0xff]
    %v89 = vld [vmem:[#allocation2 + $0x38] sm:$0xff]
    %v90 = vld [vmem:[#allocation2 + $0x40] sm:$0xff]
    %v91 = vld [vmem:[#allocation2 + $0x48] sm:$0xff]
    %v92 = vld [vmem:[#allocation5] sm:$0xff]
    %v93 = vld [vmem:[#allocation5 + $0x8] sm:$0x3]
    %v94 = vld [vmem:[%s2] sm:$0x1]
    %v96 = vlaneseq
    %v97 = vshrl.u32 %v96, 7
    %v98 = vsub.s32 0, %v97
    %v99 = vrot.slane %v94, %v98
    %vm101 = vcmask 80896
    %v103 = vsel %vm101, %v82, 0
    %v106 = vsel %vm101, %v83, 0
    %v109 = vsel %vm101, %v84, 0
    %v112 = vsel %vm101, %v85, 0
    %v115 = vsel %vm101, %v86, 0
    %v118 = vsel %vm101, %v87, 0
    %v121 = vsel %vm101, %v88, 0
    %v124 = vsel %vm101, %v89, 0
    %v127 = vsel %vm101, %v90, 0
    %v130 = vsel %vm101, %v91, 0
    %vm132 = vcmask 1041408
    %v134 = vsel %vm132, %v93, 0
    %136 = vmatprep.subr.mxu0 0.0
    %137 = vmatpush1.msra.mxu0 %v92
    %138 = vmatprep.subr.mxu0 0.0
    %139 = vmatpush1.msra.mxu0 %v134
    %140 = vmatprep.subr.mxu0 0.0
    %141 = vmatpush1.msra.mxu0 0.0
    %142 = vmatprep.subr.mxu0 0.0
    %143 = vmatpush1.msra.mxu0 0.0
    %144 = vmatprep.subr.mxu0 0.0
    %145 = vmatpush1.msra.mxu0 0.0
    %146 = vmatprep.subr.mxu0 0.0
    %147 = vmatpush1.msra.mxu0 0.0
    %148 = vmatprep.subr.mxu0 0.0
    %149 = vmatpush1.msra.mxu0 0.0
    %150 = vmatprep.subr.mxu0 0.0
    %151 = vmatpush1.msra.mxu0 0.0
    %152 = vmatprep.subr.mxu0 0.0
    %153 = vmatpush1.msra.mxu0 0.0
    %154 = vmatprep.subr.mxu0 0.0
    %155 = vmatpush1.msra.mxu0 0.0
    %156 = vmatprep.subr.mxu0 0.0
    %157 = vmatpush1.msra.mxu0 0.0
    %158 = vmatprep.subr.mxu0 0.0
    %159 = vmatpush1.msra.mxu0 0.0
    %160 = vmatprep.subr.mxu0 0.0
    %161 = vmatpush1.msra.mxu0 0.0
    %162 = vmatprep.subr.mxu0 0.0
    %163 = vmatpush1.msra.mxu0 0.0
    %164 = vmatprep.subr.mxu0 0.0
    %165 = vmatpush1.msra.mxu0 0.0
    %166 = vmatprep.subr.mxu0 0.0
    %167 = vmatpush1.msra.mxu0 0.0
    %168 = vmatprep.subr.mxu0 0.0
    %169 = vmatpush1.msra.mxu0 0.0
    %170 = vmatprep.subr.mxu0 0.0
    %171 = vmatpush1.msra.mxu0 0.0
    %172 = vmatprep.subr.mxu0 0.0
    %173 = vmatpush1.msra.mxu0 0.0
    %174 = vmatprep.subr.mxu0 0.0
    %175 = vmatpush1.msra.mxu0 0.0
    %176 = vmatprep.subr.mxu0 0.0
    %177 = vmatpush1.msra.mxu0 0.0
    %178 = vmatprep.subr.mxu0 0.0
    %179 = vmatpush1.msra.mxu0 0.0
    %180 = vmatprep.subr.mxu0 0.0
    %181 = vmatpush1.msra.mxu0 0.0
    %182 = vmatprep.subr.mxu0 0.0
    %183 = vmatpush1.msra.mxu0 0.0
    %184 = vmatprep.subr.mxu0 0.0
    %185 = vmatpush1.msra.mxu0 0.0
    %186 = vmatprep.subr.mxu0 0.0
    %187 = vmatpush1.msra.mxu0 0.0
    %188 = vmatprep.subr.mxu0 0.0
    %189 = vmatpush1.msra.mxu0 0.0
    %190 = vmatprep.subr.mxu0 0.0
    %191 = vmatpush1.msra.mxu0 0.0
    %192 = vmatprep.subr.mxu0 0.0
    %193 = vmatpush1.msra.mxu0 0.0
    %194 = vmatprep.subr.mxu0 0.0
    %195 = vmatpush1.msra.mxu0 0.0
    %196 = vmatprep.subr.mxu0 0.0
    %197 = vmatpush1.msra.mxu0 0.0
    %198 = vmatprep.subr.mxu0 0.0
    %199 = vmatpush1.msra.mxu0 0.0
    %200 = vmatprep.mubr.f32.mxu0 0.0
    %201 = vmatmul.mubr.f32.gmra.mrb[0].mxu0 %v103
    %v202 = vpop.f32.mrb[0].mxu0
    %v203 = vadd.f32 %v99, %v202
    %v204 = vpop.f32.mrb[0].mxu0
    %205 = vmatprep.mubr.f32.mxu0 0.0
    %206 = vmatmul.mubr.f32.gmra.mrb[0].mxu0 %v106
    %v207 = vpop.f32.mrb[0].mxu0
    %v208 = vadd.f32 %v99, %v207
    %v209 = vpop.f32.mrb[0].mxu0
    %210 = vmatprep.mubr.f32.mxu0 0.0
    %211 = vmatmul.mubr.f32.gmra.mrb[0].mxu0 %v109
    %v212 = vpop.f32.mrb[0].mxu0
    %v213 = vadd.f32 %v99, %v212
    %v214 = vpop.f32.mrb[0].mxu0
    %215 = vmatprep.mubr.f32.mxu0 0.0
    %216 = vmatmul.mubr.f32.gmra.mrb[0].mxu0 %v112
    %v217 = vpop.f32.mrb[0].mxu0
    %v218 = vadd.f32 %v99, %v217
    %v219 = vpop.f32.mrb[0].mxu0
    %220 = vmatprep.mubr.f32.mxu0 0.0
    %221 = vmatmul.mubr.f32.gmra.mrb[0].mxu0 %v115
    %v222 = vpop.f32.mrb[0].mxu0
    %v223 = vadd.f32 %v99, %v222
    %v224 = vpop.f32.mrb[0].mxu0
    %225 = vmatprep.mubr.f32.mxu0 0.0
    %226 = vmatmul.mubr.f32.gmra.mrb[0].mxu0 %v118
    %v227 = vpop.f32.mrb[0].mxu0
    %v228 = vadd.f32 %v99, %v227
    %v229 = vpop.f32.mrb[0].mxu0
    %230 = vmatprep.mubr.f32.mxu0 0.0
    %231 = vmatmul.mubr.f32.gmra.mrb[0].mxu0 %v121
    %v232 = vpop.f32.mrb[0].mxu0
    %v233 = vadd.f32 %v99, %v232
    %v234 = vpop.f32.mrb[0].mxu0
    %235 = vmatprep.mubr.f32.mxu0 0.0
    %236 = vmatmul.mubr.f32.gmra.mrb[0].mxu0 %v124
    %v237 = vpop.f32.mrb[0].mxu0
    %v238 = vadd.f32 %v99, %v237
    %v239 = vpop.f32.mrb[0].mxu0
    %240 = vmatprep.mubr.f32.mxu0 0.0
    %241 = vmatmul.mubr.f32.gmra.mrb[0].mxu0 %v127
    %v242 = vpop.f32.mrb[0].mxu0
    %v243 = vadd.f32 %v99, %v242
    %v244 = vpop.f32.mrb[0].mxu0
    %245 = vmatprep.mubr.f32.mxu0 0.0
    %246 = vmatmul.mubr.f32.gmra.mrb[0].mxu0 %v130
    %v247 = vpop.f32.mrb[0].mxu0
    %v248 = vadd.f32 %v99, %v247
    %v249 = vpop.f32.mrb[0].mxu0
    %250 = vdwg.mxu0
    %v251 = vld [vmem:[#allocation7] sm:$0xff]
    %v252 = vld [vmem:[#allocation7 + $0x8] sm:$0xff]
    %v253 = vld [vmem:[#allocation7 + $0x10] sm:$0xff]
    %v254 = vld [vmem:[#allocation7 + $0x18] sm:$0xff]
    %v255 = vld [vmem:[%s4] sm:$0x1]
    %v257 = vlaneseq
    %v258 = vshrl.u32 %v257, 7
    %v259 = vsub.s32 0, %v258
    %v260 = vrot.slane %v255, %v259
    %vm262 = vcmask 261120
    %v264 = vsel %vm262, %v203, 0
    %v267 = vsel %vm262, %v208, 0
    %v270 = vsel %vm262, %v213, 0
    %v273 = vsel %vm262, %v218, 0
    %v276 = vsel %vm262, %v223, 0
    %v279 = vsel %vm262, %v228, 0
    %v282 = vsel %vm262, %v233, 0
    %v285 = vsel %vm262, %v238, 0
    %v288 = vsel %vm262, %v243, 0
    %v291 = vsel %vm262, %v248, 0
    %293 = vmatprep.subr.mxu0 0.0
    %294 = vmatpush1.msra.mxu0 %v251
    %295 = vmatprep.subr.mxu0 0.0
    %296 = vmatpush1.msra.mxu0 %v252
    %297 = vmatprep.subr.mxu0 0.0
    %298 = vmatpush1.msra.mxu0 %v253
    %299 = vmatprep.subr.mxu0 0.0
    %300 = vmatpush1.msra.mxu0 %v254
    %301 = vmatprep.subr.mxu0 0.0
    %302 = vmatpush1.msra.mxu0 0.0
    %303 = vmatprep.subr.mxu0 0.0
    %304 = vmatpush1.msra.mxu0 0.0
    %305 = vmatprep.subr.mxu0 0.0
    %306 = vmatpush1.msra.mxu0 0.0
    %307 = vmatprep.subr.mxu0 0.0
    %308 = vmatpush1.msra.mxu0 0.0
    %309 = vmatprep.subr.mxu0 0.0
    %310 = vmatpush1.msra.mxu0 0.0
    %311 = vmatprep.subr.mxu0 0.0
    %312 = vmatpush1.msra.mxu0 0.0
    %313 = vmatprep.subr.mxu0 0.0
    %314 = vmatpush1.msra.mxu0 0.0
    %315 = vmatprep.subr.mxu0 0.0
    %316 = vmatpush1.msra.mxu0 0.0
    %317 = vmatprep.subr.mxu0 0.0
    %318 = vmatpush1.msra.mxu0 0.0
    %319 = vmatprep.subr.mxu0 0.0
    %320 = vmatpush1.msra.mxu0 0.0
    %321 = vmatprep.subr.mxu0 0.0
    %322 = vmatpush1.msra.mxu0 0.0
    %323 = vmatprep.subr.mxu0 0.0
    %324 = vmatpush1.msra.mxu0 0.0
    %325 = vmatprep.subr.mxu0 0.0
    %326 = vmatpush1.msra.mxu0 0.0
    %327 = vmatprep.subr.mxu0 0.0
    %328 = vmatpush1.msra.mxu0 0.0
    %329 = vmatprep.subr.mxu0 0.0
    %330 = vmatpush1.msra.mxu0 0.0
    %331 = vmatprep.subr.mxu0 0.0
    %332 = vmatpush1.msra.mxu0 0.0
    %333 = vmatprep.subr.mxu0 0.0
    %334 = vmatpush1.msra.mxu0 0.0
    %335 = vmatprep.subr.mxu0 0.0
    %336 = vmatpush1.msra.mxu0 0.0
    %337 = vmatprep.subr.mxu0 0.0
    %338 = vmatpush1.msra.mxu0 0.0
    %339 = vmatprep.subr.mxu0 0.0
    %340 = vmatpush1.msra.mxu0 0.0
    %341 = vmatprep.subr.mxu0 0.0
    %342 = vmatpush1.msra.mxu0 0.0
    %343 = vmatprep.subr.mxu0 0.0
    %344 = vmatpush1.msra.mxu0 0.0
    %345 = vmatprep.subr.mxu0 0.0
    %346 = vmatpush1.msra.mxu0 0.0
    %347 = vmatprep.subr.mxu0 0.0
    %348 = vmatpush1.msra.mxu0 0.0
    %349 = vmatprep.subr.mxu0 0.0
    %350 = vmatpush1.msra.mxu0 0.0
    %351 = vmatprep.subr.mxu0 0.0
    %352 = vmatpush1.msra.mxu0 0.0
    %353 = vmatprep.subr.mxu0 0.0
    %354 = vmatpush1.msra.mxu0 0.0
    %355 = vmatprep.subr.mxu0 0.0
    %356 = vmatpush1.msra.mxu0 0.0
    %357 = vmatprep.mubr.f32.mxu0 0.0
    %358 = vmatmul.mubr.f32.gmra.mrb[0].mxu0 %v264
    %v359 = vpop.f32.mrb[0].mxu0
    %v360 = vadd.f32 %v260, %v359
    %v361 = vpop.f32.mrb[0].mxu0
    %362 = vmatprep.mubr.f32.mxu0 0.0
    %363 = vmatmul.mubr.f32.gmra.mrb[0].mxu0 %v267
    %v364 = vpop.f32.mrb[0].mxu0
    %v365 = vadd.f32 %v260, %v364
    %v366 = vpop.f32.mrb[0].mxu0
    %367 = vmatprep.mubr.f32.mxu0 0.0
    %368 = vmatmul.mubr.f32.gmra.mrb[0].mxu0 %v270
    %v369 = vpop.f32.mrb[0].mxu0
    %v370 = vadd.f32 %v260, %v369
    %v371 = vpop.f32.mrb[0].mxu0
    %372 = vmatprep.mubr.f32.mxu0 0.0
    %373 = vmatmul.mubr.f32.gmra.mrb[0].mxu0 %v273
    %v374 = vpop.f32.mrb[0].mxu0
    %v375 = vadd.f32 %v260, %v374
    %v376 = vpop.f32.mrb[0].mxu0
    %377 = vmatprep.mubr.f32.mxu0 0.0
    %378 = vmatmul.mubr.f32.gmra.mrb[0].mxu0 %v276
    %v379 = vpop.f32.mrb[0].mxu0
    %v380 = vadd.f32 %v260, %v379
    %v381 = vpop.f32.mrb[0].mxu0
    %382 = vmatprep.mubr.f32.mxu0 0.0
    %383 = vmatmul.mubr.f32.gmra.mrb[0].mxu0 %v279
    %v384 = vpop.f32.mrb[0].mxu0
    %v385 = vadd.f32 %v260, %v384
    %v386 = vpop.f32.mrb[0].mxu0
    %387 = vmatprep.mubr.f32.mxu0 0.0
    %388 = vmatmul.mubr.f32.gmra.mrb[0].mxu0 %v282
    %v389 = vpop.f32.mrb[0].mxu0
    %v390 = vadd.f32 %v260, %v389
    %v391 = vpop.f32.mrb[0].mxu0
    %392 = vmatprep.mubr.f32.mxu0 0.0
    %393 = vmatmul.mubr.f32.gmra.mrb[0].mxu0 %v285
    %v394 = vpop.f32.mrb[0].mxu0
    %v395 = vadd.f32 %v260, %v394
    %v396 = vpop.f32.mrb[0].mxu0
    %397 = vmatprep.mubr.f32.mxu0 0.0
    %398 = vmatmul.mubr.f32.gmra.mrb[0].mxu0 %v288
    %v399 = vpop.f32.mrb[0].mxu0
    %v400 = vadd.f32 %v260, %v399
    %v401 = vpop.f32.mrb[0].mxu0
    %402 = vmatprep.mubr.f32.mxu0 0.0
    %403 = vmatmul.mubr.f32.gmra.mrb[0].mxu0 %v291
    %v404 = vpop.f32.mrb[0].mxu0
    %v405 = vadd.f32 %v260, %v404
    %v406 = vpop.f32.mrb[0].mxu0
    %407 = vdwg.mxu0
    %v408 = vld [vmem:[#allocation8] sm:$0xff]
    %v409 = vld [vmem:[#allocation8 + $0x8] sm:$0xff]
    %v410 = vld [vmem:[#allocation8 + $0x10] sm:$0xff]
    %v411 = vld [vmem:[#allocation8 + $0x18] sm:$0xff]
    %v412 = vld [vmem:[%s6] sm:$0x1]
    %v414 = vlaneseq
    %v415 = vshrl.u32 %v414, 7
    %v416 = vsub.s32 0, %v415
    %v417 = vrot.slane %v412, %v416
    %v420 = vsel %vm262, 0.0, 0
    %422 = vmatprep.subr.mxu0 0.0
    %423 = vmatpush1.msra.mxu0 %v408
    %424 = vmatprep.subr.mxu0 0.0
    %425 = vmatpush1.msra.mxu0 %v409
    %426 = vmatprep.subr.mxu0 0.0
    %427 = vmatpush1.msra.mxu0 %v410
    %428 = vmatprep.subr.mxu0 0.0
    %429 = vmatpush1.msra.mxu0 %v411
    %430 = vmatprep.subr.mxu0 0.0
    %431 = vmatpush1.msra.mxu0 0.0
    %432 = vmatprep.subr.mxu0 0.0
    %433 = vmatpush1.msra.mxu0 0.0
    %434 = vmatprep.subr.mxu0 0.0
    %435 = vmatpush1.msra.mxu0 0.0
    %436 = vmatprep.subr.mxu0 0.0
    %437 = vmatpush1.msra.mxu0 0.0
    %438 = vmatprep.subr.mxu0 0.0
    %439 = vmatpush1.msra.mxu0 0.0
    %440 = vmatprep.subr.mxu0 0.0
    %441 = vmatpush1.msra.mxu0 0.0
    %442 = vmatprep.subr.mxu0 0.0
    %443 = vmatpush1.msra.mxu0 0.0
    %444 = vmatprep.subr.mxu0 0.0
    %445 = vmatpush1.msra.mxu0 0.0
    %446 = vmatprep.subr.mxu0 0.0
    %447 = vmatpush1.msra.mxu0 0.0
    %448 = vmatprep.subr.mxu0 0.0
    %449 = vmatpush1.msra.mxu0 0.0
    %450 = vmatprep.subr.mxu0 0.0
    %451 = vmatpush1.msra.mxu0 0.0
    %452 = vmatprep.subr.mxu0 0.0
    %453 = vmatpush1.msra.mxu0 0.0
    %454 = vmatprep.subr.mxu0 0.0
    %455 = vmatpush1.msra.mxu0 0.0
    %456 = vmatprep.subr.mxu0 0.0
    %457 = vmatpush1.msra.mxu0 0.0
    %458 = vmatprep.subr.mxu0 0.0
    %459 = vmatpush1.msra.mxu0 0.0
    %460 = vmatprep.subr.mxu0 0.0
    %461 = vmatpush1.msra.mxu0 0.0
    %462 = vmatprep.subr.mxu0 0.0
    %463 = vmatpush1.msra.mxu0 0.0
    %464 = vmatprep.subr.mxu0 0.0
    %465 = vmatpush1.msra.mxu0 0.0
    %466 = vmatprep.subr.mxu0 0.0
    %467 = vmatpush1.msra.mxu0 0.0
    %468 = vmatprep.subr.mxu0 0.0
    %469 = vmatpush1.msra.mxu0 0.0
    %470 = vmatprep.subr.mxu0 0.0
    %471 = vmatpush1.msra.mxu0 0.0
    %472 = vmatprep.subr.mxu0 0.0
    %473 = vmatpush1.msra.mxu0 0.0
    %474 = vmatprep.subr.mxu0 0.0
    %475 = vmatpush1.msra.mxu0 0.0
    %476 = vmatprep.subr.mxu0 0.0
    %477 = vmatpush1.msra.mxu0 0.0
    %478 = vmatprep.subr.mxu0 0.0
    %479 = vmatpush1.msra.mxu0 0.0
    %480 = vmatprep.subr.mxu0 0.0
    %481 = vmatpush1.msra.mxu0 0.0
    %482 = vmatprep.subr.mxu0 0.0
    %483 = vmatpush1.msra.mxu0 0.0
    %484 = vmatprep.subr.mxu0 0.0
    %485 = vmatpush1.msra.mxu0 0.0
    %486 = vmatprep.mubr.f32.mxu0 0.0
    %487 = vmatmul.mubr.f32.gmra.mrb[0].mxu0 %v420
    %v488 = vpop.f32.mrb[0].mxu0
    %v489 = vadd.f32 %v417, %v488
    %v490 = vpop.f32.mrb[0].mxu0
    %491 = vmatprep.mubr.f32.mxu0 0.0
    %492 = vmatmul.mubr.f32.gmra.mrb[0].mxu0 %v420
    %v493 = vpop.f32.mrb[0].mxu0
    %v494 = vadd.f32 %v417, %v493
    %v495 = vpop.f32.mrb[0].mxu0
    %496 = vdwg.mxu0
    %v497 = vadd.f32 %v360, %v489
    %v498 = vadd.f32 %v365, %v494
    %v499 = vxor.u32 %v497, 2147483648
    %v500 = vxor.u32 %v498, 2147483648
    %v501 = vmul.f32 %v499, 1.442695
    %v502 = vpow.pop %v501
    %v503 = vmul.f32 %v500, 1.442695
    %v504 = vpow.pop %v503
    %v505 = vadd.f32 %v502, 1.0
    %v506 = vadd.f32 %v504, 1.0
    %v507 = vrcp.pop %v505
    %v508 = vmul.f32 1.0, %v507
    %v509 = vrcp.pop %v506
    %v510 = vmul.f32 1.0, %v509
    %513 = vrot.lane.b32.xlu0 %v489, 64
    %v514 = vpop.permute.xlu0 %513
    %515 = vrot.lane.b32.xlu0 %v494, 64
    %v516 = vpop.permute.xlu0 %515
    %v519 = vmul.f32 %v508, %v514
    %v520 = vmul.f32 %v510, %v516
    %523 = vrot.lane.b32.xlu0 %v519, 64
    %v524 = vpop.permute.xlu0 %523
    %525 = vrot.lane.b32.xlu0 %v520, 64
    %v526 = vpop.permute.xlu0 %525
    %v529 = vadd.f32 %v360, %v524
    %v530 = vadd.f32 %v365, %v526
    %v531 = vtanh.pop %v529
    %v532 = vtanh.pop %v530
    %v533 = vsub.f32 1.0, %v508
    %v534 = vsub.f32 1.0, %v510
    %537 = vrot.lane.b32.xlu0 %v531, 96
    %v538 = vpop.permute.xlu0 %537
    %539 = vrot.lane.b32.xlu0 %v532, 96
    %v540 = vpop.permute.xlu0 %539
    %v543 = vmul.f32 %v533, %v538
    %v544 = vmul.f32 %v534, %v540
    %v545 = vmul.f32 %v508, 0.0
    %v546 = vmul.f32 %v510, 0.0
    %v547 = vadd.f32 %v543, %v545
    %v548 = vadd.f32 %v544, %v546
    %551 = vrot.lane.b32.xlu0 %v547, 96
    %v552 = vpop.permute.xlu0 %551
    %553 = vrot.lane.b32.xlu0 %v548, 96
    %v554 = vpop.permute.xlu0 %553
    %v555 = vsel %vm262, %v552, 0
    %v557 = vsel %vm262, %v554, 0
    %559 = vmatprep.subr.mxu0 0.0
    %560 = vmatpush1.msra.mxu0 %v408
    %561 = vmatprep.subr.mxu0 0.0
    %562 = vmatpush1.msra.mxu0 %v409
    %563 = vmatprep.subr.mxu0 0.0
    %564 = vmatpush1.msra.mxu0 %v410
    %565 = vmatprep.subr.mxu0 0.0
    %566 = vmatpush1.msra.mxu0 %v411
    %567 = vmatprep.subr.mxu0 0.0
    %568 = vmatpush1.msra.mxu0 0.0
    %569 = vmatprep.subr.mxu0 0.0
    %570 = vmatpush1.msra.mxu0 0.0
    %571 = vmatprep.subr.mxu0 0.0
    %572 = vmatpush1.msra.mxu0 0.0
    %573 = vmatprep.subr.mxu0 0.0
    %574 = vmatpush1.msra.mxu0 0.0
    %575 = vmatprep.subr.mxu0 0.0
    %576 = vmatpush1.msra.mxu0 0.0
    %577 = vmatprep.subr.mxu0 0.0
    %578 = vmatpush1.msra.mxu0 0.0
    %579 = vmatprep.subr.mxu0 0.0
    %580 = vmatpush1.msra.mxu0 0.0
    %581 = vmatprep.subr.mxu0 0.0
    %582 = vmatpush1.msra.mxu0 0.0
    %583 = vmatprep.subr.mxu0 0.0
    %584 = vmatpush1.msra.mxu0 0.0
    %585 = vmatprep.subr.mxu0 0.0
    %586 = vmatpush1.msra.mxu0 0.0
    %587 = vmatprep.subr.mxu0 0.0
    %588 = vmatpush1.msra.mxu0 0.0
    %589 = vmatprep.subr.mxu0 0.0
    %590 = vmatpush1.msra.mxu0 0.0
    %591 = vmatprep.subr.mxu0 0.0
    %592 = vmatpush1.msra.mxu0 0.0
    %593 = vmatprep.subr.mxu0 0.0
    %594 = vmatpush1.msra.mxu0 0.0
    %595 = vmatprep.subr.mxu0 0.0
    %596 = vmatpush1.msra.mxu0 0.0
    %597 = vmatprep.subr.mxu0 0.0
    %598 = vmatpush1.msra.mxu0 0.0
    %599 = vmatprep.subr.mxu0 0.0
    %600 = vmatpush1.msra.mxu0 0.0
    %601 = vmatprep.subr.mxu0 0.0
    %602 = vmatpush1.msra.mxu0 0.0
    %603 = vmatprep.subr.mxu0 0.0
    %604 = vmatpush1.msra.mxu0 0.0
    %605 = vmatprep.subr.mxu0 0.0
    %606 = vmatpush1.msra.mxu0 0.0
    %607 = vmatprep.subr.mxu0 0.0
    %608 = vmatpush1.msra.mxu0 0.0
    %609 = vmatprep.subr.mxu0 0.0
    %610 = vmatpush1.msra.mxu0 0.0
    %611 = vmatprep.subr.mxu0 0.0
    %612 = vmatpush1.msra.mxu0 0.0
    %613 = vmatprep.subr.mxu0 0.0
    %614 = vmatpush1.msra.mxu0 0.0
    %615 = vmatprep.subr.mxu0 0.0
    %616 = vmatpush1.msra.mxu0 0.0
    %617 = vmatprep.subr.mxu0 0.0
    %618 = vmatpush1.msra.mxu0 0.0
    %619 = vmatprep.subr.mxu0 0.0
    %620 = vmatpush1.msra.mxu0 0.0
    %621 = vmatprep.subr.mxu0 0.0
    %622 = vmatpush1.msra.mxu0 0.0
    %623 = vmatprep.mubr.f32.mxu0 0.0
    %624 = vmatmul.mubr.f32.gmra.mrb[0].mxu0 %v555
    %v625 = vpop.f32.mrb[0].mxu0
    %v626 = vadd.f32 %v417, %v625
    %v627 = vpop.f32.mrb[0].mxu0
    %628 = vmatprep.mubr.f32.mxu0 0.0
    %629 = vmatmul.mubr.f32.gmra.mrb[0].mxu0 %v557
    %v630 = vpop.f32.mrb[0].mxu0
    %v631 = vadd.f32 %v417, %v630
    %v632 = vpop.f32.mrb[0].mxu0
    %633 = vdwg.mxu0
    %v634 = vadd.f32 %v370, %v626
    %v635 = vadd.f32 %v375, %v631
    %v636 = vxor.u32 %v634, 2147483648
    %v637 = vxor.u32 %v635, 2147483648
    %v638 = vmul.f32 %v636, 1.442695
    %v639 = vpow.pop %v638
    %v640 = vmul.f32 %v637, 1.442695
    %v641 = vpow.pop %v640
    %v642 = vadd.f32 %v639, 1.0
    %v643 = vadd.f32 %v641, 1.0
    %v644 = vrcp.pop %v642
    %v645 = vmul.f32 1.0, %v644
    %v646 = vrcp.pop %v643
    %v647 = vmul.f32 1.0, %v646
    %650 = vrot.lane.b32.xlu0 %v626, 64
    %v651 = vpop.permute.xlu0 %650
    %652 = vrot.lane.b32.xlu0 %v631, 64
    %v653 = vpop.permute.xlu0 %652
    %v656 = vmul.f32 %v645, %v651
    %v657 = vmul.f32 %v647, %v653
    %660 = vrot.lane.b32.xlu0 %v656, 64
    %v661 = vpop.permute.xlu0 %660
    %662 = vrot.lane.b32.xlu0 %v657, 64
    %v663 = vpop.permute.xlu0 %662
    %v666 = vadd.f32 %v370, %v661
    %v667 = vadd.f32 %v375, %v663
    %v668 = vtanh.pop %v666
    %v669 = vtanh.pop %v667
    %v670 = vsub.f32 1.0, %v645
    %v671 = vsub.f32 1.0, %v647
    %674 = vrot.lane.b32.xlu0 %v668, 96
    %v675 = vpop.permute.xlu0 %674
    %676 = vrot.lane.b32.xlu0 %v669, 96
    %v677 = vpop.permute.xlu0 %676
    %v680 = vmul.f32 %v670, %v675
    %v681 = vmul.f32 %v671, %v677
    %v682 = vmul.f32 %v645, %v547
    %v683 = vmul.f32 %v647, %v548
    %v684 = vadd.f32 %v680, %v682
    %v685 = vadd.f32 %v681, %v683
    %688 = vrot.lane.b32.xlu0 %v684, 96
    %v689 = vpop.permute.xlu0 %688
    %690 = vrot.lane.b32.xlu0 %v685, 96
    %v691 = vpop.permute.xlu0 %690
    %v692 = vsel %vm262, %v689, 0
    %v694 = vsel %vm262, %v691, 0
    %696 = vmatprep.subr.mxu0 0.0
    %697 = vmatpush1.msra.mxu0 %v408
    %698 = vmatprep.subr.mxu0 0.0
    %699 = vmatpush1.msra.mxu0 %v409
    %700 = vmatprep.subr.mxu0 0.0
    %701 = vmatpush1.msra.mxu0 %v410
    %702 = vmatprep.subr.mxu0 0.0
    %703 = vmatpush1.msra.mxu0 %v411
    %704 = vmatprep.subr.mxu0 0.0
    %705 = vmatpush1.msra.mxu0 0.0
    %706 = vmatprep.subr.mxu0 0.0
    %707 = vmatpush1.msra.mxu0 0.0
    %708 = vmatprep.subr.mxu0 0.0
    %709 = vmatpush1.msra.mxu0 0.0
    %710 = vmatprep.subr.mxu0 0.0
    %711 = vmatpush1.msra.mxu0 0.0
    %712 = vmatprep.subr.mxu0 0.0
    %713 = vmatpush1.msra.mxu0 0.0
    %714 = vmatprep.subr.mxu0 0.0
    %715 = vmatpush1.msra.mxu0 0.0
    %716 = vmatprep.subr.mxu0 0.0
    %717 = vmatpush1.msra.mxu0 0.0
    %718 = vmatprep.subr.mxu0 0.0
    %719 = vmatpush1.msra.mxu0 0.0
    %720 = vmatprep.subr.mxu0 0.0
    %721 = vmatpush1.msra.mxu0 0.0
    %722 = vmatprep.subr.mxu0 0.0
    %723 = vmatpush1.msra.mxu0 0.0
    %724 = vmatprep.subr.mxu0 0.0
    %725 = vmatpush1.msra.mxu0 0.0
    %726 = vmatprep.subr.mxu0 0.0
    %727 = vmatpush1.msra.mxu0 0.0
    %728 = vmatprep.subr.mxu0 0.0
    %729 = vmatpush1.msra.mxu0 0.0
    %730 = vmatprep.subr.mxu0 0.0
    %731 = vmatpush1.msra.mxu0 0.0
    %732 = vmatprep.subr.mxu0 0.0
    %733 = vmatpush1.msra.mxu0 0.0
    %734 = vmatprep.subr.mxu0 0.0
    %735 = vmatpush1.msra.mxu0 0.0
    %736 = vmatprep.subr.mxu0 0.0
    %737 = vmatpush1.msra.mxu0 0.0
    %738 = vmatprep.subr.mxu0 0.0
    %739 = vmatpush1.msra.mxu0 0.0
    %740 = vmatprep.subr.mxu0 0.0
    %741 = vmatpush1.msra.mxu0 0.0
    %742 = vmatprep.subr.mxu0 0.0
    %743 = vmatpush1.msra.mxu0 0.0
    %744 = vmatprep.subr.mxu0 0.0
    %745 = vmatpush1.msra.mxu0 0.0
    %746 = vmatprep.subr.mxu0 0.0
    %747 = vmatpush1.msra.mxu0 0.0
    %748 = vmatprep.subr.mxu0 0.0
    %749 = vmatpush1.msra.mxu0 0.0
    %750 = vmatprep.subr.mxu0 0.0
    %751 = vmatpush1.msra.mxu0 0.0
    %752 = vmatprep.subr.mxu0 0.0
    %753 = vmatpush1.msra.mxu0 0.0
    %754 = vmatprep.subr.mxu0 0.0
    %755 = vmatpush1.msra.mxu0 0.0
    %756 = vmatprep.subr.mxu0 0.0
    %757 = vmatpush1.msra.mxu0 0.0
    %758 = vmatprep.subr.mxu0 0.0
    %759 = vmatpush1.msra.mxu0 0.0
    %760 = vmatprep.mubr.f32.mxu0 0.0
    %761 = vmatmul.mubr.f32.gmra.mrb[0].mxu0 %v692
    %v762 = vpop.f32.mrb[0].mxu0
    %v763 = vadd.f32 %v417, %v762
    %v764 = vpop.f32.mrb[0].mxu0
    %765 = vmatprep.mubr.f32.mxu0 0.0
    %766 = vmatmul.mubr.f32.gmra.mrb[0].mxu0 %v694
    %v767 = vpop.f32.mrb[0].mxu0
    %v768 = vadd.f32 %v417, %v767
    %v769 = vpop.f32.mrb[0].mxu0
    %770 = vdwg.mxu0
    %v771 = vadd.f32 %v380, %v763
    %v772 = vadd.f32 %v385, %v768
    %v773 = vxor.u32 %v771, 2147483648
    %v774 = vxor.u32 %v772, 2147483648
    %v775 = vmul.f32 %v773, 1.442695
    %v776 = vpow.pop %v775
    %v777 = vmul.f32 %v774, 1.442695
    %v778 = vpow.pop %v777
    %v779 = vadd.f32 %v776, 1.0
    %v780 = vadd.f32 %v778, 1.0
    %v781 = vrcp.pop %v779
    %v782 = vmul.f32 1.0, %v781
    %v783 = vrcp.pop %v780
    %v784 = vmul.f32 1.0, %v783
    %787 = vrot.lane.b32.xlu0 %v763, 64
    %v788 = vpop.permute.xlu0 %787
    %789 = vrot.lane.b32.xlu0 %v768, 64
    %v790 = vpop.permute.xlu0 %789
    %v793 = vmul.f32 %v782, %v788
    %v794 = vmul.f32 %v784, %v790
    %797 = vrot.lane.b32.xlu0 %v793, 64
    %v798 = vpop.permute.xlu0 %797
    %799 = vrot.lane.b32.xlu0 %v794, 64
    %v800 = vpop.permute.xlu0 %799
    %v803 = vadd.f32 %v380, %v798
    %v804 = vadd.f32 %v385, %v800
    %v805 = vtanh.pop %v803
    %v806 = vtanh.pop %v804
    %v807 = vsub.f32 1.0, %v782
    %v808 = vsub.f32 1.0, %v784
    %811 = vrot.lane.b32.xlu0 %v805, 96
    %v812 = vpop.permute.xlu0 %811
    %813 = vrot.lane.b32.xlu0 %v806, 96
    %v814 = vpop.permute.xlu0 %813
    %v817 = vmul.f32 %v807, %v812
    %v818 = vmul.f32 %v808, %v814
    %v819 = vmul.f32 %v782, %v684
    %v820 = vmul.f32 %v784, %v685
    %v821 = vadd.f32 %v817, %v819
    %v822 = vadd.f32 %v818, %v820
    %825 = vrot.lane.b32.xlu0 %v821, 96
    %v826 = vpop.permute.xlu0 %825
    %827 = vrot.lane.b32.xlu0 %v822, 96
    %v828 = vpop.permute.xlu0 %827
    %v829 = vsel %vm262, %v826, 0
    %v831 = vsel %vm262, %v828, 0
    %833 = vmatprep.subr.mxu0 0.0
    %834 = vmatpush1.msra.mxu0 %v408
    %835 = vmatprep.subr.mxu0 0.0
    %836 = vmatpush1.msra.mxu0 %v409
    %837 = vmatprep.subr.mxu0 0.0
    %838 = vmatpush1.msra.mxu0 %v410
    %839 = vmatprep.subr.mxu0 0.0
    %840 = vmatpush1.msra.mxu0 %v411
    %841 = vmatprep.subr.mxu0 0.0
    %842 = vmatpush1.msra.mxu0 0.0
    %843 = vmatprep.subr.mxu0 0.0
    %844 = vmatpush1.msra.mxu0 0.0
    %845 = vmatprep.subr.mxu0 0.0
    %846 = vmatpush1.msra.mxu0 0.0
    %847 = vmatprep.subr.mxu0 0.0
    %848 = vmatpush1.msra.mxu0 0.0
    %849 = vmatprep.subr.mxu0 0.0
    %850 = vmatpush1.msra.mxu0 0.0
    %851 = vmatprep.subr.mxu0 0.0
    %852 = vmatpush1.msra.mxu0 0.0
    %853 = vmatprep.subr.mxu0 0.0
    %854 = vmatpush1.msra.mxu0 0.0
    %855 = vmatprep.subr.mxu0 0.0
    %856 = vmatpush1.msra.mxu0 0.0
    %857 = vmatprep.subr.mxu0 0.0
    %858 = vmatpush1.msra.mxu0 0.0
    %859 = vmatprep.subr.mxu0 0.0
    %860 = vmatpush1.msra.mxu0 0.0
    %861 = vmatprep.subr.mxu0 0.0
    %862 = vmatpush1.msra.mxu0 0.0
    %863 = vmatprep.subr.mxu0 0.0
    %864 = vmatpush1.msra.mxu0 0.0
    %865 = vmatprep.subr.mxu0 0.0
    %866 = vmatpush1.msra.mxu0 0.0
    %867 = vmatprep.subr.mxu0 0.0
    %868 = vmatpush1.msra.mxu0 0.0
    %869 = vmatprep.subr.mxu0 0.0
    %870 = vmatpush1.msra.mxu0 0.0
    %871 = vmatprep.subr.mxu0 0.0
    %872 = vmatpush1.msra.mxu0 0.0
    %873 = vmatprep.subr.mxu0 0.0
    %874 = vmatpush1.msra.mxu0 0.0
    %875 = vmatprep.subr.mxu0 0.0
    %876 = vmatpush1.msra.mxu0 0.0
    %877 = vmatprep.subr.mxu0 0.0
    %878 = vmatpush1.msra.mxu0 0.0
    %879 = vmatprep.subr.mxu0 0.0
    %880 = vmatpush1.msra.mxu0 0.0
    %881 = vmatprep.subr.mxu0 0.0
    %882 = vmatpush1.msra.mxu0 0.0
    %883 = vmatprep.subr.mxu0 0.0
    %884 = vmatpush1.msra.mxu0 0.0
    %885 = vmatprep.subr.mxu0 0.0
    %886 = vmatpush1.msra.mxu0 0.0
    %887 = vmatprep.subr.mxu0 0.0
    %888 = vmatpush1.msra.mxu0 0.0
    %889 = vmatprep.subr.mxu0 0.0
    %890 = vmatpush1.msra.mxu0 0.0
    %891 = vmatprep.subr.mxu0 0.0
    %892 = vmatpush1.msra.mxu0 0.0
    %893 = vmatprep.subr.mxu0 0.0
    %894 = vmatpush1.msra.mxu0 0.0
    %895 = vmatprep.subr.mxu0 0.0
    %896 = vmatpush1.msra.mxu0 0.0
    %897 = vmatprep.mubr.f32.mxu0 0.0
    %898 = vmatmul.mubr.f32.gmra.mrb[0].mxu0 %v829
    %v899 = vpop.f32.mrb[0].mxu0
    %v900 = vadd.f32 %v417, %v899
    %v901 = vpop.f32.mrb[0].mxu0
    %902 = vmatprep.mubr.f32.mxu0 0.0
    %903 = vmatmul.mubr.f32.gmra.mrb[0].mxu0 %v831
    %v904 = vpop.f32.mrb[0].mxu0
    %v905 = vadd.f32 %v417, %v904
    %v906 = vpop.f32.mrb[0].mxu0
    %907 = vdwg.mxu0
    %v908 = vadd.f32 %v390, %v900
    %v909 = vadd.f32 %v395, %v905
    %v910 = vxor.u32 %v908, 2147483648
    %v911 = vxor.u32 %v909, 2147483648
    %v912 = vmul.f32 %v910, 1.442695
    %v913 = vpow.pop %v912
    %v914 = vmul.f32 %v911, 1.442695
    %v915 = vpow.pop %v914
    %v916 = vadd.f32 %v913, 1.0
    %v917 = vadd.f32 %v915, 1.0
    %v918 = vrcp.pop %v916
    %v919 = vmul.f32 1.0, %v918
    %v920 = vrcp.pop %v917
    %v921 = vmul.f32 1.0, %v920
    %924 = vrot.lane.b32.xlu0 %v900, 64
    %v925 = vpop.permute.xlu0 %924
    %926 = vrot.lane.b32.xlu0 %v905, 64
    %v927 = vpop.permute.xlu0 %926
    %v930 = vmul.f32 %v919, %v925
    %v931 = vmul.f32 %v921, %v927
    %934 = vrot.lane.b32.xlu0 %v930, 64
    %v935 = vpop.permute.xlu0 %934
    %936 = vrot.lane.b32.xlu0 %v931, 64
    %v937 = vpop.permute.xlu0 %936
    %v940 = vadd.f32 %v390, %v935
    %v941 = vadd.f32 %v395, %v937
    %v942 = vtanh.pop %v940
    %v943 = vtanh.pop %v941
    %v944 = vsub.f32 1.0, %v919
    %v945 = vsub.f32 1.0, %v921
    %948 = vrot.lane.b32.xlu0 %v942, 96
    %v949 = vpop.permute.xlu0 %948
    %950 = vrot.lane.b32.xlu0 %v943, 96
    %v951 = vpop.permute.xlu0 %950
    %v954 = vmul.f32 %v944, %v949
    %v955 = vmul.f32 %v945, %v951
    %v956 = vmul.f32 %v919, %v821
    %v957 = vmul.f32 %v921, %v822
    %v958 = vadd.f32 %v954, %v956
    %v959 = vadd.f32 %v955, %v957
    %962 = vrot.lane.b32.xlu0 %v958, 96
    %v963 = vpop.permute.xlu0 %962
    %964 = vrot.lane.b32.xlu0 %v959, 96
    %v965 = vpop.permute.xlu0 %964
    %v966 = vsel %vm262, %v963, 0
    %v968 = vsel %vm262, %v965, 0
    %970 = vmatprep.subr.mxu0 0.0
    %971 = vmatpush1.msra.mxu0 %v408
    %972 = vmatprep.subr.mxu0 0.0
    %973 = vmatpush1.msra.mxu0 %v409
    %974 = vmatprep.subr.mxu0 0.0
    %975 = vmatpush1.msra.mxu0 %v410
    %976 = vmatprep.subr.mxu0 0.0
    %977 = vmatpush1.msra.mxu0 %v411
    %978 = vmatprep.subr.mxu0 0.0
    %979 = vmatpush1.msra.mxu0 0.0
    %980 = vmatprep.subr.mxu0 0.0
    %981 = vmatpush1.msra.mxu0 0.0
    %982 = vmatprep.subr.mxu0 0.0
    %983 = vmatpush1.msra.mxu0 0.0
    %984 = vmatprep.subr.mxu0 0.0
    %985 = vmatpush1.msra.mxu0 0.0
    %986 = vmatprep.subr.mxu0 0.0
    %987 = vmatpush1.msra.mxu0 0.0
    %988 = vmatprep.subr.mxu0 0.0
    %989 = vmatpush1.msra.mxu0 0.0
    %990 = vmatprep.subr.mxu0 0.0
    %991 = vmatpush1.msra.mxu0 0.0
    %992 = vmatprep.subr.mxu0 0.0
    %993 = vmatpush1.msra.mxu0 0.0
    %994 = vmatprep.subr.mxu0 0.0
    %995 = vmatpush1.msra.mxu0 0.0
    %996 = vmatprep.subr.mxu0 0.0
    %997 = vmatpush1.msra.mxu0 0.0
    %998 = vmatprep.subr.mxu0 0.0
    %999 = vmatpush1.msra.mxu0 0.0
    %1000 = vmatprep.subr.mxu0 0.0
    %1001 = vmatpush1.msra.mxu0 0.0
    %1002 = vmatprep.subr.mxu0 0.0
    %1003 = vmatpush1.msra.mxu0 0.0
    %1004 = vmatprep.subr.mxu0 0.0
    %1005 = vmatpush1.msra.mxu0 0.0
    %1006 = vmatprep.subr.mxu0 0.0
    %1007 = vmatpush1.msra.mxu0 0.0
    %1008 = vmatprep.subr.mxu0 0.0
    %1009 = vmatpush1.msra.mxu0 0.0
    %1010 = vmatprep.subr.mxu0 0.0
    %1011 = vmatpush1.msra.mxu0 0.0
    %1012 = vmatprep.subr.mxu0 0.0
    %1013 = vmatpush1.msra.mxu0 0.0
    %1014 = vmatprep.subr.mxu0 0.0
    %1015 = vmatpush1.msra.mxu0 0.0
    %1016 = vmatprep.subr.mxu0 0.0
    %1017 = vmatpush1.msra.mxu0 0.0
    %1018 = vmatprep.subr.mxu0 0.0
    %1019 = vmatpush1.msra.mxu0 0.0
    %1020 = vmatprep.subr.mxu0 0.0
    %1021 = vmatpush1.msra.mxu0 0.0
    %1022 = vmatprep.subr.mxu0 0.0
    %1023 = vmatpush1.msra.mxu0 0.0
    %1024 = vmatprep.subr.mxu0 0.0
    %1025 = vmatpush1.msra.mxu0 0.0
    %1026 = vmatprep.subr.mxu0 0.0
    %1027 = vmatpush1.msra.mxu0 0.0
    %1028 = vmatprep.subr.mxu0 0.0
    %1029 = vmatpush1.msra.mxu0 0.0
    %1030 = vmatprep.subr.mxu0 0.0
    %1031 = vmatpush1.msra.mxu0 0.0
    %1032 = vmatprep.subr.mxu0 0.0
    %1033 = vmatpush1.msra.mxu0 0.0
    %1034 = vmatprep.mubr.f32.mxu0 0.0
    %1035 = vmatmul.mubr.f32.gmra.mrb[0].mxu0 %v966
    %v1036 = vpop.f32.mrb[0].mxu0
    %v1037 = vadd.f32 %v417, %v1036
    %v1038 = vpop.f32.mrb[0].mxu0
    %1039 = vmatprep.mubr.f32.mxu0 0.0
    %1040 = vmatmul.mubr.f32.gmra.mrb[0].mxu0 %v968
    %v1041 = vpop.f32.mrb[0].mxu0
    %v1042 = vadd.f32 %v417, %v1041
    %v1043 = vpop.f32.mrb[0].mxu0
    %1044 = vdwg.mxu0
    %v1045 = vadd.f32 %v400, %v1037
    %v1046 = vadd.f32 %v405, %v1042
    %v1047 = vxor.u32 %v1045, 2147483648
    %v1048 = vxor.u32 %v1046, 2147483648
    %v1049 = vmul.f32 %v1047, 1.442695
    %v1050 = vpow.pop %v1049
    %v1051 = vmul.f32 %v1048, 1.442695
    %v1052 = vpow.pop %v1051
    %v1053 = vadd.f32 %v1050, 1.0
    %v1054 = vadd.f32 %v1052, 1.0
    %v1055 = vrcp.pop %v1053
    %v1056 = vmul.f32 1.0, %v1055
    %v1057 = vrcp.pop %v1054
    %v1058 = vmul.f32 1.0, %v1057
    %1061 = vrot.lane.b32.xlu0 %v1037, 64
    %v1062 = vpop.permute.xlu0 %1061
    %1063 = vrot.lane.b32.xlu0 %v1042, 64
    %v1064 = vpop.permute.xlu0 %1063
    %v1067 = vmul.f32 %v1056, %v1062
    %v1068 = vmul.f32 %v1058, %v1064
    %1071 = vrot.lane.b32.xlu0 %v1067, 64
    %v1072 = vpop.permute.xlu0 %1071
    %1073 = vrot.lane.b32.xlu0 %v1068, 64
    %v1074 = vpop.permute.xlu0 %1073
    %v1077 = vadd.f32 %v400, %v1072
    %v1078 = vadd.f32 %v405, %v1074
    %v1079 = vtanh.pop %v1077
    %v1080 = vtanh.pop %v1078
    %v1081 = vsub.f32 1.0, %v1056
    %v1082 = vsub.f32 1.0, %v1058
    %1085 = vrot.lane.b32.xlu0 %v1079, 96
    %v1086 = vpop.permute.xlu0 %1085
    %1087 = vrot.lane.b32.xlu0 %v1080, 96
    %v1088 = vpop.permute.xlu0 %1087
    %v1091 = vmul.f32 %v1081, %v1086
    %v1092 = vmul.f32 %v1082, %v1088
    %v1093 = vmul.f32 %v1056, %v958
    %v1094 = vmul.f32 %v1058, %v959
    %v1095 = vadd.f32 %v1091, %v1093
    %v1096 = vadd.f32 %v1092, %v1094
    %1099 = vrot.lane.b32.xlu0 %v1095, 96
    %v1100 = vpop.permute.xlu0 %1099
    %1101 = vrot.lane.b32.xlu0 %v1096, 96
    %v1102 = vpop.permute.xlu0 %1101
    %1105 = vst.msk [vmem:[#allocation10] sm:$0xff] %vm262, %v1100
    %1106 = vst.msk [vmem:[#allocation10 + $0x8] sm:$0xff] %vm262, %v1102
    // Predicated region
    $region46: #{tpu_custom_call.1} parent=1 // pred_check
      _
    $region47: #{tpu_custom_call.1} parent=1 // pred_check_branch
      %1108 = sbr.rel (0) target = $region49
    $region48: #{tpu_custom_call.1} parent=1 // pred_region
      %s1110 = ssub.s32 256, 256
      %1111 = vsyncadd [#allocation4], %s1110
      %s1112 = sshll.u32 [#allocation10], 4
      %s1113 = int_to_ptr.vmem [resolvable:$true] %s1112
      %1118 = dma.vmem_to_hbm [thread:$0]  %s1113, 256, %s7, [#allocation4], 128, 128, 8
    $region49: #{tpu_custom_call.1} parent=1 // pred_fallthru
      _
    // Predicated region
    $region50: #{tpu_custom_call.1} parent=1 // pred_check
      _
    $region51: #{tpu_custom_call.1} parent=1 // pred_check_branch
      %1120 = sbr.rel (0) target = $region53
    $region52: #{tpu_custom_call.1} parent=1 // pred_region
      %1121 = dma.done [#allocation4], 256
    $region53: #{tpu_custom_call.1} parent=1 // pred_fallthru
      _
    %1122 = vsyncpa [#allocation3], 1
    %1123 = vsyncpa [#allocation6], 1
    %1124 = vsyncpa [#allocation9], 1
    %1125 = vsyncpa [#allocation4], 1

</llo_original>
